<compile_context>
chip_gen: v5e
topology: v5e:2x2
jax: 0.10.0
libtpu: 0.0.40
codegen_flags: <defaults>
</compile_context>

<pallas_src>
import jax
import jax.numpy as jnp
from jax.experimental import pallas as pl
from jax.experimental.pallas import tpu as pltpu


def _mean_kernel(x_ref, len_ref, o_ref, acc_ref):
    # x_ref:   (TB, TS, D)  input tile (f32 or bf16)
    # len_ref: (TB, 1)      int32 valid-token count per sequence
    # o_ref:   (TB, D)      float32 per-sequence means
    # acc_ref: (TB, D)      float32 running sum, persists across the S axis
    si = pl.program_id(1)
    tb, ts, d = x_ref.shape

    @pl.when(si == 0)
    def _init():
        acc_ref[...] = jnp.zeros_like(acc_ref)

    lens = len_ref[...]  # (TB, 1) int32

    # 3-D iota along the sublane (token) axis: pure VPU, no cross-lane
    # relayout (a (TB, TS) mask would need S moved from lanes to sublanes).
    tok = si * ts + jax.lax.broadcasted_iota(jnp.int32, (tb, ts, d), dimension=1)
    valid = tok < lens[:, :, None]  # (TB, TS, D) bool

    # jnp.where (not multiply): garbage from out-of-bounds edge reads can
    # never poison the sum (NaN * 0 == NaN, but where(False, NaN, 0) == 0).
    x = jnp.where(valid, x_ref[...].astype(jnp.float32), 0.0)
    acc_ref[...] += jnp.sum(x, axis=1)  # (TB, D) f32 accumulate

    @pl.when(si == pl.num_programs(1) - 1)
    def _finalize():
        # Approximate reciprocal -> EUP slot; precision is ample for a mean
        # divisor. Zero-length rows are clamped to 1 (output stays 0).
        inv_len = pl.reciprocal(
            jnp.maximum(lens.astype(jnp.float32), 1.0), approx=True)  # (TB, 1)
        o_ref[...] = acc_ref[...] * inv_len


def _tile_budget():
    """Return (per-input-buffer byte budget, vmem_limit_bytes), per generation.

    Budgets are deliberately a bit below half the scoped limit to leave
    headroom for double buffering plus the in-kernel f32 / mask intermediates.
    Measured mem-bound kernels already sit at ~85%+ of HBM roofline with
    1-4 MiB tiles, so these budgets capture essentially all the bandwidth.
    """
    try:
        vmem_cap = int(getattr(pltpu.get_tpu_info(), "vmem_capacity_bytes",
                               64 * 1024 * 1024))
    except Exception:  # pragma: no cover - e.g. interpret mode off-TPU
        vmem_cap = 64 * 1024 * 1024
    if vmem_cap <= 64 * 1024 * 1024:
        # v7x-class: 64 MiB VMEM per TensorCore -> keep the scoped limit small.
        return 4 * 1024 * 1024, 40 * 1024 * 1024
    # v5e / v6e: 128 MiB VMEM -> bigger tiles, higher scoped limit.
    return 8 * 1024 * 1024, 80 * 1024 * 1024


def mean_aggregator(x, lengths=None, *, block_b=None, block_s=None):
    """x: (B, S, D) float array (f32 or bf16), lengths: optional (B,) ints.

    Returns (B, D) float32 where row i is the mean over the first lengths[i]
    tokens of sequence i (lengths defaults to S for every row).
    """
    B, S, D = x.shape
    itemsize = jnp.dtype(x.dtype).itemsize
    row_bytes = D * itemsize

    tile_budget, vmem_limit = _tile_budget()

    # --- token tile TS: full S when it fits at TB=8, else a multiple of 8.
    if block_s is not None:
        ts = block_s
    elif S <= 8 or 8 * S * row_bytes <= tile_budget:
        ts = S  # equal to the full dim -> always a legal block dim
    else:
        ts = max(8, min(S // 8 * 8, (tile_budget // (8 * row_bytes)) // 8 * 8))

    # --- batch tile TB: multiple of 8, grown while the tile fits the budget.
    # No fixed upper cap beyond the (rounded-up) batch itself.
    if block_b is not None:
        tb = block_b
    else:
        tb = 8
        tb_cover = max(8, pl.cdiv(B, 8) * 8)
        while tb * 2 <= tb_cover and 2 * tb * ts * row_bytes <= tile_budget:
            tb *= 2
        # Keep >= 2 steps on the "parallel" batch axis when possible so both
        # v7x TensorCores get work (harmless on single-core v5e/v6e).
        if pl.cdiv(B, tb) == 1 and B > 8:
            tb = max(8, pl.cdiv(pl.cdiv(B, 2), 8) * 8)

    grid = (pl.cdiv(B, tb), pl.cdiv(S, ts))

    # Only the tiny lengths vector is padded: rows >= B get length 0, so every
    # token of an out-of-bounds batch row is masked; x itself stays unpadded.
    if lengths is None:
        lengths = jnp.full((B,), S, dtype=jnp.int32)
    lengths = jnp.clip(jnp.asarray(lengths, dtype=jnp.int32).reshape(B), 0, S)
    Bp = grid[0] * tb
    len_p = jnp.zeros((Bp, 1), dtype=jnp.int32).at[:B, 0].set(lengths)

    cost = pl.CostEstimate(
        flops=2 * B * S * D + 2 * B * D,
        transcendentals=B,
        bytes_accessed=B * S * D * itemsize + B * D * 4 + Bp * 4,
    )

    return pl.pallas_call(
        _mean_kernel,
        out_shape=jax.ShapeDtypeStruct((B, D), jnp.float32),
        grid_spec=pltpu.PrefetchScalarGridSpec(
            num_scalar_prefetch=0,
            grid=grid,
            in_specs=[
                pl.BlockSpec((tb, ts, D), lambda b, s: (b, s, 0)),
                pl.BlockSpec((tb, 1), lambda b, s: (b, 0)),
            ],
            out_specs=pl.BlockSpec((tb, D), lambda b, s: (b, 0)),
            scratch_shapes=[pltpu.VMEM((tb, D), jnp.float32)],
        ),
        compiler_params=pltpu.CompilerParams(
            dimension_semantics=("parallel", "arbitrary"),
            vmem_limit_bytes=vmem_limit,
        ),
        cost_estimate=cost,
    )(x, len_p)


if __name__ == "__main__":
    key = jax.random.PRNGKey(0)
    B, S, D = 2, 8, 32  # 2 sequences, 8 tokens each, embedding size 32
    x = jax.random.normal(key, (B, S, D), dtype=jnp.float32)

    # Dense equal-length case (matches torch.mean over the token axis).
    out = jax.block_until_ready(mean_aggregator(x))
    ref = jnp.mean(x, axis=1)
    assert out.shape == (B, D)
    assert out.dtype == jnp.float32
    assert jnp.allclose(out, ref, atol=2e-3, rtol=2e-3)

    # Ragged case: second sequence has only 5 valid tokens.
    lengths = jnp.array([8, 5], dtype=jnp.int32)
    out_r = jax.block_until_ready(mean_aggregator(x, lengths))
    ref_r = jnp.stack([jnp.mean(x[0, :8], axis=0), jnp.mean(x[1, :5], axis=0)])
    assert jnp.allclose(out_r, ref_r, atol=2e-3, rtol=2e-3)

    print("KERNEL_OK")
</pallas_src>

<mosaic_0001>
module attributes {stable_mosaic.version = 11 : i64} {
  func.func @_mean_kernel(%arg0: i32, %arg1: i32, %arg2: memref<8x8x32xf32, #tpu.memory_space<vmem>>, %arg3: memref<8x1xi32, #tpu.memory_space<vmem>>, %arg4: memref<8x32xf32, #tpu.memory_space<vmem>>, %arg5: memref<8x32xf32, #tpu.memory_space<vmem>>) attributes {dimension_semantics = [#tpu.dimension_semantics<parallel>, #tpu.dimension_semantics<arbitrary>], iteration_bounds = array<i64: 1, 1>, scalar_prefetch = 0 : i64, scratch_operands = 1 : i64, tpu.core_type = #tpu.core_type<tc>, window_params = [{transform_indices = @transform_0, window_bounds = array<i64: 8, 8, 32>}, {transform_indices = @transform_1, window_bounds = array<i64: 8, 1>}, {transform_indices = @transform_2, window_bounds = array<i64: 8, 32>}]} {
    %c0_i32 = arith.constant 0 : i32
    %0 = arith.cmpi eq, %arg1, %c0_i32 : i32
    %1 = arith.extui %0 : i1 to i32
    %c0_i32_0 = arith.constant 0 : i32
    %2 = arith.cmpi ne, %1, %c0_i32_0 : i32
    scf.if %2 {
      %cst_12 = arith.constant 0.000000e+00 : f32
      %21 = vector.broadcast %cst_12 : f32 to vector<8x32xf32>
      %c0_13 = arith.constant 0 : index
      %c0_14 = arith.constant 0 : index
      %22 = vector.load %arg5[%c0_13, %c0_14] : memref<8x32xf32, #tpu.memory_space<vmem>>, vector<8x32xf32>
      tpu.vector_store %arg5[%c0_13, %c0_14], %21 {strides = array<i32>} : memref<8x32xf32, #tpu.memory_space<vmem>>, vector<8x32xf32>,
    } else {
    }
    %c0 = arith.constant 0 : index
    %c0_1 = arith.constant 0 : index
    %3 = vector.load %arg3[%c0, %c0_1] : memref<8x1xi32, #tpu.memory_space<vmem>>, vector<8x1xi32>
    %c8_i32 = arith.constant 8 : i32
    %4 = arith.muli %arg1, %c8_i32 : i32
    %5 = tpu.iota {dimensions = array<i32: 1>} : vector<8x8x32xi32>
    %6 = vector.broadcast %4 : i32 to vector<8x8x32xi32>
    %7 = arith.addi %6, %5 : vector<8x8x32xi32>
    %8 = vector.shape_cast %3 : vector<8x1xi32> to vector<8x1x1xi32>
    %9 = vector.broadcast %8 : vector<8x1x1xi32> to vector<8x8x32xi32>
    %10 = arith.cmpi slt, %7, %9 : vector<8x8x32xi32>
    %c0_2 = arith.constant 0 : index
    %c0_3 = arith.constant 0 : index
    %c0_4 = arith.constant 0 : index
    %11 = vector.load %arg2[%c0_2, %c0_3, %c0_4] : memref<8x8x32xf32, #tpu.memory_space<vmem>>, vector<8x8x32xf32>
    %cst = arith.constant 0.000000e+00 : f32
    %12 = vector.broadcast %cst : f32 to vector<8x8x32xf32>
    %13 = arith.select %10, %11, %12 : vector<8x8x32xi1>, vector<8x8x32xf32>
    %c0_5 = arith.constant 0 : index
    %c0_6 = arith.constant 0 : index
    %14 = vector.load %arg5[%c0_5, %c0_6] : memref<8x32xf32, #tpu.memory_space<vmem>>, vector<8x32xf32>
    %cst_7 = arith.constant dense<0.000000e+00> : vector<8x32xf32>
    %15 = vector.multi_reduction <add>, %13, %cst_7 [1] : vector<8x8x32xf32> to vector<8x32xf32>
    %16 = arith.addf %14, %15 : vector<8x32xf32>
    %c0_8 = arith.constant 0 : index
    %c0_9 = arith.constant 0 : index
    %17 = vector.load %arg5[%c0_8, %c0_9] : memref<8x32xf32, #tpu.memory_space<vmem>>, vector<8x32xf32>
    tpu.vector_store %arg5[%c0_8, %c0_9], %16 {strides = array<i32>} : memref<8x32xf32, #tpu.memory_space<vmem>>, vector<8x32xf32>,
    %c0_i32_10 = arith.constant 0 : i32
    %18 = arith.cmpi eq, %arg1, %c0_i32_10 : i32
    %19 = arith.extui %18 : i1 to i32
    %c0_i32_11 = arith.constant 0 : i32
    %20 = arith.cmpi ne, %19, %c0_i32_11 : i32
    scf.if %20 {
      %21 = arith.sitofp %3 : vector<8x1xi32> to vector<8x1xf32>
      %cst_12 = arith.constant 1.000000e+00 : f32
      %22 = vector.broadcast %cst_12 : f32 to vector<8x1xf32>
      %23 = arith.maximumf %21, %22 : vector<8x1xf32>
      %24 = tpu.reciprocal %23 {approx = true} : vector<8x1xf32> -> vector<8x1xf32>
      %c0_13 = arith.constant 0 : index
      %c0_14 = arith.constant 0 : index
      %25 = vector.load %arg5[%c0_13, %c0_14] : memref<8x32xf32, #tpu.memory_space<vmem>>, vector<8x32xf32>
      %26 = vector.broadcast %24 : vector<8x1xf32> to vector<8x32xf32>
      %27 = arith.mulf %25, %26 : vector<8x32xf32>
      %c0_15 = arith.constant 0 : index
      %c0_16 = arith.constant 0 : index
      %28 = vector.load %arg4[%c0_15, %c0_16] : memref<8x32xf32, #tpu.memory_space<vmem>>, vector<8x32xf32>
      tpu.vector_store %arg4[%c0_15, %c0_16], %27 {strides = array<i32>} : memref<8x32xf32, #tpu.memory_space<vmem>>, vector<8x32xf32>,
    } else {
    }
    return
  }
  func.func @transform_0(%arg0: i32, %arg1: i32) -> (i32, i32, i32) {
    %c0_i32 = arith.constant 0 : i32
    %c0_i32_0 = arith.constant 0 : i32
    return %arg0, %arg1, %c0_i32 : i32, i32, i32
  }
  func.func @transform_1(%arg0: i32, %arg1: i32) -> (i32, i32) {
    %c0_i32 = arith.constant 0 : i32
    %c0_i32_0 = arith.constant 0 : i32
    return %arg0, %c0_i32 : i32, i32
  }
  func.func @transform_2(%arg0: i32, %arg1: i32) -> (i32, i32) {
    %c0_i32 = arith.constant 0 : i32
    %c0_i32_0 = arith.constant 0 : i32
    return %arg0, %c0_i32 : i32, i32
  }
}

</mosaic_0001>

<llo_original>
// kernel: tpu_custom_call.1
$region0: #{tpu_custom_call.1}
  #allocation0 [shape = 'u32[]', space=smem, size = 0x4, offset = 0x4, fixed_abs, tag = 'smem constant byte address 0x4 - core index']
  #allocation1 [shape = 'u32[72,128]{1,0:T(1,128)}', space=vmem, size = 0x9000, scoped, tag = 'internal scratch']
  #allocation2 [shape = 'f32[8,32]{1,0:T(8,128)}', space=vmem, size = 0x1000, scoped, tag = 'scratch operand']
  %s0 = inlined_call_operand.hbm [shape: f32[2,8,32], index: 0, kind: input, shape index: {}]
  %s1 = inlined_call_operand.vmem [shape: s32[8,1], index: 1, kind: input, shape index: {}]
  %s2 = inlined_call_operand.hbm [shape: f32[2,32], index: 2, kind: output, shape index: {}]
  %s3 = sld [smem:[#allocation0]]
  $region30: #{tpu_custom_call.1} parent=0
    _
  %s5 = ssub.s32 1, %s3
  %s6 = scalar_select 0, %s5, %s3
  $region1: #{tpu_custom_call.1} parent=0
    #allocation3 [shape = 'u8[32768]{0}', space=vmem, size = 0x8000, scoped, tag = 'input window, operand 0, single buffered']
    #allocation4 [shape = 's32[1]{0}', space=sflag, size = 0x4, scoped, tag = 'scoped memory for tpu_custom_call.1']
    #allocation5 [shape = 's32[1]{0}', space=sflag, size = 0x4, scoped, tag = 'scoped memory for tpu_custom_call.1']
    #allocation6 [shape = 'u8[4096]{0}', space=vmem, size = 0x1000, scoped, tag = 'output window, operand 0, single buffered']
    %7 = vsyncpa [#allocation4], 0
    %8 = vsyncpa [#allocation5], 0
    // Predicated region
    $region2: #{tpu_custom_call.1} parent=1 // pred_check
      _
    $region3: #{tpu_custom_call.1} parent=1 // pred_check_branch
      %10 = sbr.rel (0) target = $region5
    $region4: #{tpu_custom_call.1} parent=1 // pred_region
      %12 = vsyncadd [#allocation4], 768
      %s13 = sshll.u32 %s0, 4
      %s14 = int_to_ptr.hbm [resolvable:$true] %s13
      %s15 = sshll.u32 [#allocation3], 4
      %s16 = int_to_ptr.vmem [resolvable:$true] %s15
      %21 = dma.hbm_to_vmem [thread:$0]  %s14, 256, %s16, [#allocation4], 128, 128, 8
    $region5: #{tpu_custom_call.1} parent=1 // pred_fallthru
      _
    // Predicated region
    $region6: #{tpu_custom_call.1} parent=1 // pred_check
      _
    $region7: #{tpu_custom_call.1} parent=1 // pred_check_branch
      %23 = sbr.rel (0) target = $region9
    $region8: #{tpu_custom_call.1} parent=1 // pred_region
      _
    $region9: #{tpu_custom_call.1} parent=1 // pred_fallthru
      _
    // Predicated region
    $region10: #{tpu_custom_call.1} parent=1 // pred_check
      _
    $region11: #{tpu_custom_call.1} parent=1 // pred_check_branch
      %25 = sbr.rel (0) target = $region13
    $region12: #{tpu_custom_call.1} parent=1 // pred_region
      %27 = dma.done [#allocation4], 1024
    $region13: #{tpu_custom_call.1} parent=1 // pred_fallthru
      _
    %p28 = scmp.eq.s32.totalorder 0, 0
    // Predicated region
    $region14: #{tpu_custom_call.1} parent=1 // pred_check
      %p29 = pneg %p28
    $region15: #{tpu_custom_call.1} parent=1 // pred_check_branch
      %31 = sbr.rel (%p29) target = $region17
    $region16: #{tpu_custom_call.1} parent=1 // pred_region
      %vm32 = vcmask 261120
      %33 = vst.msk [vmem:[#allocation2] sm:$0xff] %vm32, 0.0
    $region17: #{tpu_custom_call.1} parent=1 // pred_fallthru
      _
    %v34 = vld [vmem:[%s1] sm:$0xff]
    %s35 = smul.u32 0, 8
    %v36 = vlaneseq
    %v37 = vshrl.u32 %v36, 7
    %v38 = vstv %s35
    %v39 = vadd.s32 %v38, %v37
    %v40 = vrot.slane %v34, 1
    %v41 = vrot.slane %v34, 2
    %v42 = vrot.slane %v34, 3
    %v43 = vrot.slane %v34, 4
    %v44 = vrot.slane %v34, 5
    %v45 = vrot.slane %v34, 6
    %v46 = vrot.slane %v34, 7
    %v47 = vperm.slane %v34, 0
    %v48 = vperm.slane %v40, 0
    %v49 = vperm.slane %v41, 0
    %v50 = vperm.slane %v42, 0
    %v51 = vperm.slane %v43, 0
    %v52 = vperm.slane %v44, 0
    %v53 = vperm.slane %v45, 0
    %v54 = vperm.slane %v46, 0
    %55 = vset.pattern.permute.xlu0 0
    %56 = vperm.xlu0 %55, %v47
    %v57 = vpop.permute.xlu0 %56
    %58 = vset.pattern.permute.xlu0 0
    %59 = vperm.xlu0 %58, %v48
    %v60 = vpop.permute.xlu0 %59
    %61 = vset.pattern.permute.xlu0 0
    %62 = vperm.xlu0 %61, %v49
    %v63 = vpop.permute.xlu0 %62
    %64 = vset.pattern.permute.xlu0 0
    %65 = vperm.xlu0 %64, %v50
    %v66 = vpop.permute.xlu0 %65
    %67 = vset.pattern.permute.xlu0 0
    %68 = vperm.xlu0 %67, %v51
    %v69 = vpop.permute.xlu0 %68
    %70 = vset.pattern.permute.xlu0 0
    %71 = vperm.xlu0 %70, %v52
    %v72 = vpop.permute.xlu0 %71
    %73 = vset.pattern.permute.xlu0 0
    %74 = vperm.xlu0 %73, %v53
    %v75 = vpop.permute.xlu0 %74
    %76 = vset.pattern.permute.xlu0 0
    %77 = vperm.xlu0 %76, %v54
    %v78 = vpop.permute.xlu0 %77
    %vm79 = vcmp.lt.s32.totalorder %v39, %v57
    %vm80 = vcmp.lt.s32.totalorder %v39, %v60
    %vm81 = vcmp.lt.s32.totalorder %v39, %v63
    %vm82 = vcmp.lt.s32.totalorder %v39, %v66
    %vm83 = vcmp.lt.s32.totalorder %v39, %v69
    %vm84 = vcmp.lt.s32.totalorder %v39, %v72
    %vm85 = vcmp.lt.s32.totalorder %v39, %v75
    %vm86 = vcmp.lt.s32.totalorder %v39, %v78
    %v87 = vld [vmem:[#allocation3] sm:$0xff]
    %v88 = vld [vmem:[#allocation3 + $0x8] sm:$0xff]
    %v89 = vld [vmem:[#allocation3 + $0x10] sm:$0xff]
    %v90 = vld [vmem:[#allocation3 + $0x18] sm:$0xff]
    %v91 = vld [vmem:[#allocation3 + $0x20] sm:$0xff]
    %v92 = vld [vmem:[#allocation3 + $0x28] sm:$0xff]
    %v93 = vld [vmem:[#allocation3 + $0x30] sm:$0xff]
    %v94 = vld [vmem:[#allocation3 + $0x38] sm:$0xff]
    %v95 = vsel %vm79, %v87, 0.0
    %v96 = vsel %vm80, %v88, 0.0
    %v97 = vsel %vm81, %v89, 0.0
    %v98 = vsel %vm82, %v90, 0.0
    %v99 = vsel %vm83, %v91, 0.0
    %v100 = vsel %vm84, %v92, 0.0
    %v101 = vsel %vm85, %v93, 0.0
    %v102 = vsel %vm86, %v94, 0.0
    %v103 = vld [vmem:[#allocation2] sm:$0xff]
    %vm104 = vcmask 261120
    %v105 = vsel %vm104, %v95, 0.0
    %v106 = vrot.slane %v105, 4
    %v107 = vadd.f32 %v105, %v106
    %v108 = vrot.slane %v107, 2
    %v109 = vadd.f32 %v107, %v108
    %v110 = vrot.slane %v109, 1
    %v111 = vadd.f32 %v109, %v110
    %v112 = vsel %vm104, %v96, 0.0
    %v113 = vrot.slane %v112, 4
    %v114 = vadd.f32 %v112, %v113
    %v115 = vrot.slane %v114, 2
    %v116 = vadd.f32 %v114, %v115
    %v117 = vrot.slane %v116, 1
    %v118 = vadd.f32 %v116, %v117
    %v119 = vsel %vm104, %v97, 0.0
    %v120 = vrot.slane %v119, 4
    %v121 = vadd.f32 %v119, %v120
    %v122 = vrot.slane %v121, 2
    %v123 = vadd.f32 %v121, %v122
    %v124 = vrot.slane %v123, 1
    %v125 = vadd.f32 %v123, %v124
    %v126 = vsel %vm104, %v98, 0.0
    %v127 = vrot.slane %v126, 4
    %v128 = vadd.f32 %v126, %v127
    %v129 = vrot.slane %v128, 2
    %v130 = vadd.f32 %v128, %v129
    %v131 = vrot.slane %v130, 1
    %v132 = vadd.f32 %v130, %v131
    %v133 = vsel %vm104, %v99, 0.0
    %v134 = vrot.slane %v133, 4
    %v135 = vadd.f32 %v133, %v134
    %v136 = vrot.slane %v135, 2
    %v137 = vadd.f32 %v135, %v136
    %v138 = vrot.slane %v137, 1
    %v139 = vadd.f32 %v137, %v138
    %v140 = vsel %vm104, %v100, 0.0
    %v141 = vrot.slane %v140, 4
    %v142 = vadd.f32 %v140, %v141
    %v143 = vrot.slane %v142, 2
    %v144 = vadd.f32 %v142, %v143
    %v145 = vrot.slane %v144, 1
    %v146 = vadd.f32 %v144, %v145
    %v147 = vsel %vm104, %v101, 0.0
    %v148 = vrot.slane %v147, 4
    %v149 = vadd.f32 %v147, %v148
    %v150 = vrot.slane %v149, 2
    %v151 = vadd.f32 %v149, %v150
    %v152 = vrot.slane %v151, 1
    %v153 = vadd.f32 %v151, %v152
    %v154 = vsel %vm104, %v102, 0.0
    %v155 = vrot.slane %v154, 4
    %v156 = vadd.f32 %v154, %v155
    %v157 = vrot.slane %v156, 2
    %v158 = vadd.f32 %v156, %v157
    %v159 = vrot.slane %v158, 1
    %v160 = vadd.f32 %v158, %v159
    %vm169 = vcmask 1041409
    %v170 = vsel %vm169, %v118, %v111
    %vm171 = vcmask 1042434
    %v172 = vsel %vm171, %v125, %v170
    %vm173 = vcmask 1043459
    %v174 = vsel %vm173, %v132, %v172
    %vm175 = vcmask 1044484
    %v176 = vsel %vm175, %v139, %v174
    %vm177 = vcmask 1045509
    %v178 = vsel %vm177, %v146, %v176
    %vm179 = vcmask 1046534
    %v180 = vsel %vm179, %v153, %v178
    %vm181 = vcmask 1047559
    %v182 = vsel %vm181, %v160, %v180
    %v184 = vadd.f32 %v103, %v182
    %185 = vst.msk [vmem:[#allocation2] sm:$0xff] %vm104, %v184
    // Predicated region
    $region18: #{tpu_custom_call.1} parent=1 // pred_check
      %p186 = pneg %p28
    $region19: #{tpu_custom_call.1} parent=1 // pred_check_branch
      %188 = sbr.rel (%p186) target = $region21
    $region20: #{tpu_custom_call.1} parent=1 // pred_region
      %v189 = vcvt.s32.f32 %v34
      %v190 = vmax.f32 %v189, 1.0
      %v191 = vrcp.pop %v190
      %v192 = vld [vmem:[#allocation2] sm:$0xff]
      %194 = vset.pattern.permute.xlu0 0
      %195 = vperm.xlu0 %194, %v191
      %v196 = vpop.permute.xlu0 %195
      %v198 = vmul.f32 %v192, %v196
      %199 = vst.msk [vmem:[#allocation6] sm:$0xff] %vm104, %v198
    $region21: #{tpu_custom_call.1} parent=1 // pred_fallthru
      _
    // Predicated region
    $region22: #{tpu_custom_call.1} parent=1 // pred_check
      _
    $region23: #{tpu_custom_call.1} parent=1 // pred_check_branch
      %201 = sbr.rel (0) target = $region25
    $region24: #{tpu_custom_call.1} parent=1 // pred_region
      %203 = vsyncadd [#allocation5], 96
      %s204 = sshll.u32 [#allocation6], 4
      %s205 = int_to_ptr.vmem [resolvable:$true] %s204
      %s206 = sshll.u32 %s2, 4
      %s207 = int_to_ptr.hbm [resolvable:$true] %s206
      %212 = dma.vmem_to_hbm [thread:$0]  %s205, 32, %s207, [#allocation5], 32, 32, 2
    $region25: #{tpu_custom_call.1} parent=1 // pred_fallthru
      _
    // Predicated region
    $region26: #{tpu_custom_call.1} parent=1 // pred_check
      _
    $region27: #{tpu_custom_call.1} parent=1 // pred_check_branch
      %214 = sbr.rel (0) target = $region29
    $region28: #{tpu_custom_call.1} parent=1 // pred_region
      %216 = dma.done [#allocation5], 128
    $region29: #{tpu_custom_call.1} parent=1 // pred_fallthru
      _
    %217 = vsyncpa [#allocation4], 1
    %218 = vsyncpa [#allocation5], 1

</llo_original>
